<compile_context>
chip_gen: v7x
topology: tpu7x:2x2x1
jax: 0.10.0
libtpu: 0.0.40
codegen_flags: <defaults>
</compile_context>

<pallas_src>
import jax
import jax.numpy as jnp
from jax import lax
from jax.experimental import pallas as pl
from jax.experimental.pallas import tpu as pltpu

LANE = 128
SUBLANE = 8


def _round_up(x, m):
    return (x + m - 1) // m * m


def _sublane_pack(dtype) -> int:
    # Native sublane packing: 8 rows for 4-byte, 16 for 2-byte, 32 for 1-byte.
    itemsize = jnp.dtype(dtype).itemsize
    return max(SUBLANE, 32 // max(int(itemsize), 1))


def _num_tensorcores() -> int:
    """TensorCores to shard the outer grid axis over (1 on v5e/v6e, 2 on v7x)."""
    try:
        info = pltpu.get_tpu_info()
        for name in ("num_cores", "core_count", "num_tensorcores", "tensorcore_count"):
            v = getattr(info, name, None)
            if isinstance(v, int) and v > 0:
                return int(v)
    except Exception:
        pass
    try:
        v = getattr(jax.devices()[0], "num_cores", None)
        if isinstance(v, int) and v > 0:
            return int(v)
    except Exception:
        pass
    return 1


def content_loss(prediction, target, *, target_block_bytes=2 << 20,
                 sub_rows=256, ncores=None):
    """L1 loss mean(|prediction - target|) as a Pallas TPU reduction kernel."""
    assert prediction.shape == target.shape
    n = int(prediction.size)
    assert n > 0

    p = prediction.reshape(-1)
    t = target.reshape(-1)

    # --- lane-dense (rows, 128) view -------------------------------------
    # Zero-copy reshape when n % 128 == 0 (typical for VGG feature maps).
    # Otherwise pad only to the next multiple of 128 (|0-0| = 0 contribution);
    # this is the only case that still materializes a copy.
    padded_n = _round_up(n, LANE)
    if padded_n != n:
        p = jnp.pad(p, (0, padded_n - n))
        t = jnp.pad(t, (0, padded_n - n))
    rows = padded_n // LANE
    p = p.reshape(rows, LANE)
    t = t.reshape(rows, LANE)

    pack = max(_sublane_pack(p.dtype), _sublane_pack(t.dtype))
    itemsize = max(jnp.dtype(p.dtype).itemsize, jnp.dtype(t.dtype).itemsize)

    # Per-step DMA tile: ~target_block_bytes per input, rounded to the dtype's
    # native sublane packing and clamped for small inputs.
    block_rows = max(pack, (target_block_bytes // (LANE * itemsize)) // pack * pack)
    block_rows = min(block_rows, _round_up(rows, pack))

    chunks = pl.cdiv(rows, block_rows)
    if ncores is None:
        ncores = _num_tensorcores()
    ncores = max(1, min(int(ncores), chunks))
    chunks_per_core = pl.cdiv(chunks, ncores)
    uneven = (chunks_per_core * ncores) != chunks      # some steps have no work
    ragged = (rows % block_rows) != 0                   # last block reads past end

    # Inner sub-slice size bounds per-step f32 intermediates (live vregs),
    # independent of how big the DMA tile is.
    if block_rows % sub_rows != 0:
        sub_rows = block_rows
    n_sub = block_rows // sub_rows

    # --- kernel ------------------------------------------------------------
    def kernel(pred_ref, tgt_ref, out_ref):
        i = pl.program_id(1)

        @pl.when(i == 0)
        def _init():
            out_ref[...] = jnp.zeros_like(out_ref)

        def accumulate():
            base_row = (pl.program_id(0) * chunks_per_core + i) * block_rows

            def body(j, acc):
                r0 = pl.multiple_of(j * sub_rows, sub_rows)
                pv = pred_ref[pl.ds(r0, sub_rows), :].astype(jnp.float32)
                tv = tgt_ref[pl.ds(r0, sub_rows), :].astype(jnp.float32)
                ad = jnp.abs(pv - tv)
                if ragged:
                    # Mask rows past the true row count (garbage from the
                    # ragged last block).  Row indices always fit in int32.
                    row = (base_row + r0
                           + lax.broadcasted_iota(jnp.int32, ad.shape, 0))
                    ad = jnp.where(row < rows, ad, 0.0)
                # (sub_rows,128) -> (sub_rows//8, 8, 128); sum over axis 0 is
                # pure element-wise vreg adds (VPU), no XLU reduce in the loop.
                return acc + jnp.sum(ad.reshape(-1, SUBLANE, LANE), axis=0)

            acc = lax.fori_loop(0, n_sub, body,
                                jnp.zeros((SUBLANE, LANE), jnp.float32),
                                unroll=True)
            out_ref[...] += acc

        if uneven:
            flat = pl.program_id(0) * chunks_per_core + i
            pl.when(flat < chunks)(accumulate)
        else:
            accumulate()

    # --- specs ---------------------------------------------------------------
    if uneven:
        def in_map(c, i):
            # Clamp so overhang steps stay in-bounds; their compute is gated off.
            return (jnp.minimum(c * chunks_per_core + i, chunks - 1), 0)
    else:
        def in_map(c, i):
            return (c * chunks_per_core + i, 0)

    tile_bytes = block_rows * LANE * (jnp.dtype(p.dtype).itemsize
                                      + jnp.dtype(t.dtype).itemsize)
    # 2 pipeline buffers per input + accumulator + headroom; margin under v7x 64 MiB.
    vmem_limit = int(min(48 << 20, max(8 << 20, 2 * tile_bytes + (4 << 20))))

    partials = pl.pallas_call(
        kernel,
        out_shape=jax.ShapeDtypeStruct((ncores, SUBLANE, LANE), jnp.float32),
        grid_spec=pltpu.PrefetchScalarGridSpec(
            num_scalar_prefetch=0,
            grid=(ncores, chunks_per_core),
            in_specs=[
                pl.BlockSpec((block_rows, LANE), in_map),
                pl.BlockSpec((block_rows, LANE), in_map),
            ],
            out_specs=pl.BlockSpec((None, SUBLANE, LANE), lambda c, i: (c, 0, 0)),
        ),
        compiler_params=pltpu.CompilerParams(
            dimension_semantics=("parallel", "arbitrary"),
            vmem_limit_bytes=vmem_limit,
        ),
    )(p, t)

    # Tiny (ncores*8*128) reduction + mean scale in XLA; n is the true count.
    return jnp.sum(partials) * (1.0 / float(n))


class ContentLoss:
    """Mirror of the PyTorch module: forward(prediction, target) -> L1 loss."""

    def __call__(self, prediction, target):
        return content_loss(prediction, target)


def _reference_content_loss(prediction, target):
    return jnp.mean(jnp.abs(prediction.astype(jnp.float32)
                            - target.astype(jnp.float32)))


if __name__ == "__main__":
    key = jax.random.PRNGKey(0)
    k1, k2, k3, k4 = jax.random.split(key, 4)

    # Main example: VGG-feature-like shapes.
    B, C, H, W = 2, 4, 16, 16
    prediction = jax.random.normal(k1, (B, C, H, W), jnp.float32)
    target = jax.random.normal(k2, (B, C, H, W), jnp.float32)

    loss = ContentLoss()(prediction, target)
    jax.block_until_ready(loss)
    ref = _reference_content_loss(prediction, target)
    assert jnp.allclose(loss, ref, rtol=1e-5, atol=1e-6), (loss, ref)

    # Odd shape: exercises the lane-pad + ragged-last-block mask path.
    p2 = jax.random.normal(k3, (3, 5, 7, 11), jnp.float32)
    t2 = jax.random.normal(k4, (3, 5, 7, 11), jnp.float32)
    loss2 = content_loss(p2, t2)
    jax.block_until_ready(loss2)
    ref2 = _reference_content_loss(p2, t2)
    assert jnp.allclose(loss2, ref2, rtol=1e-5, atol=1e-6), (loss2, ref2)

    # Forced 2-way core split with tiny blocks: exercises uneven split
    # (index_map clamp + pl.when gate); runs as a serial loop on 1-TC chips.
    p3 = jax.random.normal(k1, (3, 4, 16, 16), jnp.float32)
    t3 = jax.random.normal(k2, (3, 4, 16, 16), jnp.float32)
    loss3 = content_loss(p3, t3, target_block_bytes=8 * LANE * 4, ncores=2)
    jax.block_until_ready(loss3)
    ref3 = _reference_content_loss(p3, t3)
    assert jnp.allclose(loss3, ref3, rtol=1e-5, atol=1e-6), (loss3, ref3)

    print("KERNEL_OK")
</pallas_src>

<mosaic_0001>
module attributes {stable_mosaic.version = 11 : i64} {
  func.func @kernel(%arg0: i32, %arg1: i32, %arg2: memref<16x128xf32, #tpu.memory_space<vmem>>, %arg3: memref<16x128xf32, #tpu.memory_space<vmem>>, %arg4: memref<1x8x128xf32, #tpu.memory_space<vmem>>) attributes {dimension_semantics = [#tpu.dimension_semantics<parallel>, #tpu.dimension_semantics<arbitrary>], iteration_bounds = array<i64: 1, 1>, scalar_prefetch = 0 : i64, scratch_operands = 0 : i64, tpu.core_type = #tpu.core_type<tc>, window_params = [{transform_indices = @transform_0, window_bounds = array<i64: 16, 128>}, {transform_indices = @transform_1, window_bounds = array<i64: 16, 128>}, {transform_indices = @transform_2, window_bounds = array<i64: 1, 8, 128>}]} {
    %c0_i32 = arith.constant 0 : i32
    %0 = arith.cmpi eq, %arg1, %c0_i32 : i32
    %1 = arith.extui %0 : i1 to i32
    %c0_i32_0 = arith.constant 0 : i32
    %2 = arith.cmpi ne, %1, %c0_i32_0 : i32
    scf.if %2 {
      %cst_10 = arith.constant 0.000000e+00 : f32
      %21 = vector.broadcast %cst_10 : f32 to vector<8x128xf32>
      %c0_11 = arith.constant 0 : index
      %c0_12 = arith.constant 0 : index
      %c0_13 = arith.constant 0 : index
      %22 = vector.load %arg4[%c0_11, %c0_12, %c0_13] : memref<1x8x128xf32, #tpu.memory_space<vmem>>, vector<1x8x128xf32>
      %23 = vector.shape_cast %22 : vector<1x8x128xf32> to vector<8x128xf32>
      %24 = vector.shape_cast %21 : vector<8x128xf32> to vector<1x8x128xf32>
      tpu.vector_store %arg4[%c0_11, %c0_12, %c0_13], %24 {strides = array<i32>} : memref<1x8x128xf32, #tpu.memory_space<vmem>>, vector<1x8x128xf32>,
    } else {
    }
    %cst = arith.constant 0.000000e+00 : f32
    %3 = vector.broadcast %cst : f32 to vector<8x128xf32>
    %c0_i32_1 = arith.constant 0 : i32
    %c16_i32 = arith.constant 16 : i32
    %4 = arith.muli %c0_i32_1, %c16_i32 : i32
    %5 = tpu.assume_multiple %4, 16 : i32
    %6 = arith.index_cast %5 : i32 to index
    %c0 = arith.constant 0 : index
    %7 = vector.load %arg2[%6, %c0] : memref<16x128xf32, #tpu.memory_space<vmem>>, vector<16x128xf32>
    %8 = arith.index_cast %5 : i32 to index
    %c0_2 = arith.constant 0 : index
    %9 = vector.load %arg3[%8, %c0_2] : memref<16x128xf32, #tpu.memory_space<vmem>>, vector<16x128xf32>
    %10 = arith.subf %7, %9 : vector<16x128xf32>
    %11 = math.absf %10 : vector<16x128xf32>
    %12 = vector.shape_cast %11 : vector<16x128xf32> to vector<2x8x128xf32>
    %cst_3 = arith.constant dense<0.000000e+00> : vector<8x128xf32>
    %13 = vector.multi_reduction <add>, %12, %cst_3 [0] : vector<2x8x128xf32> to vector<8x128xf32>
    %14 = arith.addf %3, %13 : vector<8x128xf32>
    %c1_i32 = arith.constant 1 : i32
    %c0_4 = arith.constant 0 : index
    %c0_5 = arith.constant 0 : index
    %c0_6 = arith.constant 0 : index
    %15 = vector.load %arg4[%c0_4, %c0_5, %c0_6] : memref<1x8x128xf32, #tpu.memory_space<vmem>>, vector<1x8x128xf32>
    %16 = vector.shape_cast %15 : vector<1x8x128xf32> to vector<8x128xf32>
    %17 = arith.addf %16, %14 : vector<8x128xf32>
    %c0_7 = arith.constant 0 : index
    %c0_8 = arith.constant 0 : index
    %c0_9 = arith.constant 0 : index
    %18 = vector.load %arg4[%c0_7, %c0_8, %c0_9] : memref<1x8x128xf32, #tpu.memory_space<vmem>>, vector<1x8x128xf32>
    %19 = vector.shape_cast %18 : vector<1x8x128xf32> to vector<8x128xf32>
    %20 = vector.shape_cast %17 : vector<8x128xf32> to vector<1x8x128xf32>
    tpu.vector_store %arg4[%c0_7, %c0_8, %c0_9], %20 {strides = array<i32>} : memref<1x8x128xf32, #tpu.memory_space<vmem>>, vector<1x8x128xf32>,
    return
  }
  func.func @transform_0(%arg0: i32, %arg1: i32) -> (i32, i32) {
    %c1_i32 = arith.constant 1 : i32
    %0 = arith.muli %arg0, %c1_i32 : i32
    %1 = arith.addi %0, %arg1 : i32
    %c0_i32 = arith.constant 0 : i32
    %c0_i32_0 = arith.constant 0 : i32
    return %1, %c0_i32 : i32, i32
  }
  func.func @transform_1(%arg0: i32, %arg1: i32) -> (i32, i32) {
    %c1_i32 = arith.constant 1 : i32
    %0 = arith.muli %arg0, %c1_i32 : i32
    %1 = arith.addi %0, %arg1 : i32
    %c0_i32 = arith.constant 0 : i32
    %c0_i32_0 = arith.constant 0 : i32
    return %1, %c0_i32 : i32, i32
  }
  func.func @transform_2(%arg0: i32, %arg1: i32) -> (i32, i32, i32) {
    %c0_i32 = arith.constant 0 : i32
    %c0_i32_0 = arith.constant 0 : i32
    %c0_i32_1 = arith.constant 0 : i32
    return %arg0, %c0_i32, %c0_i32_0 : i32, i32, i32
  }
}

</mosaic_0001>

<llo_original>
// kernel: tpu_custom_call.1
$region0: #{tpu_custom_call.1}
  #allocation0 [shape = 'u32[]', space=smem, size = 0x4, offset = 0x4, fixed_abs, tag = 'smem constant byte address 0x4 - core index']
  #allocation1 [shape = 'u32[144,128]{1,0:T(1,128)}', space=vmem, size = 0x12000, scoped, tag = 'internal scratch']
  %s0 = inlined_call_operand.hbm [shape: f32[16,128], index: 0, kind: input, shape index: {}]
  %s1 = inlined_call_operand.hbm [shape: f32[16,128], index: 1, kind: input, shape index: {}]
  %s2 = inlined_call_operand.hbm [shape: f32[1,8,128], index: 2, kind: output, shape index: {}]
  %s3 = sld [smem:[#allocation0]]
  $region30: #{tpu_custom_call.1} parent=0
    _
  %s5 = ssub.s32 1, %s3
  %s6 = scalar_select 0, %s5, %s3
  $region1: #{tpu_custom_call.1} parent=0
    #allocation2 [shape = 'u8[8192]{0}', space=vmem, size = 0x2000, scoped, tag = 'input window, operand 0, single buffered']
    #allocation3 [shape = 's32[1]{0}', space=sflag, size = 0x4, scoped, tag = 'scoped memory for tpu_custom_call.1']
    #allocation4 [shape = 's32[1]{0}', space=sflag, size = 0x4, scoped, tag = 'scoped memory for tpu_custom_call.1']
    #allocation5 [shape = 'u8[8192]{0}', space=vmem, size = 0x2000, scoped, tag = 'input window, operand 1, single buffered']
    #allocation6 [shape = 's32[1]{0}', space=sflag, size = 0x4, scoped, tag = 'scoped memory for tpu_custom_call.1']
    #allocation7 [shape = 'u8[4096]{0}', space=vmem, size = 0x1000, scoped, tag = 'output window, operand 0, single buffered']
    %7 = vsyncpa [#allocation3], 0
    %8 = vsyncpa [#allocation6], 0
    %9 = vsyncpa [#allocation4], 0
    // Predicated region
    $region2: #{tpu_custom_call.1} parent=1 // pred_check
      _
    $region3: #{tpu_custom_call.1} parent=1 // pred_check_branch
      %11 = sbr.rel (0) target = $region5
    $region4: #{tpu_custom_call.1} parent=1 // pred_region
      %s12 = sadd.s32 0, 0
      %s13 = smul.u32 2, %s12
      %s15 = ssub.s32 256, 256
      %16 = vsyncadd [#allocation3], %s15
      %s17 = smul.addr %s13, 128
      %s18 = scalar_lea.hbm %s0, %s17
      %s19 = sshll.u32 [#allocation2], 4
      %s20 = int_to_ptr.vmem [resolvable:$true] %s19
      %25 = dma.hbm_to_vmem [thread:$0]  %s18, 256, %s20, [#allocation3], 128, 128, 8
    $region5: #{tpu_custom_call.1} parent=1 // pred_fallthru
      _
    // Predicated region
    $region6: #{tpu_custom_call.1} parent=1 // pred_check
      _
    $region7: #{tpu_custom_call.1} parent=1 // pred_check_branch
      %27 = sbr.rel (0) target = $region9
    $region8: #{tpu_custom_call.1} parent=1 // pred_region
      %s28 = sadd.s32 0, 0
      %s29 = smul.u32 2, %s28
      %s31 = ssub.s32 256, 256
      %32 = vsyncadd [#allocation6], %s31
      %s33 = smul.addr %s29, 128
      %s34 = scalar_lea.hbm %s1, %s33
      %s35 = sshll.u32 [#allocation5], 4
      %s36 = int_to_ptr.vmem [resolvable:$true] %s35
      %41 = dma.hbm_to_vmem [thread:$0]  %s34, 256, %s36, [#allocation6], 128, 128, 8
    $region9: #{tpu_custom_call.1} parent=1 // pred_fallthru
      _
    // Predicated region
    $region10: #{tpu_custom_call.1} parent=1 // pred_check
      _
    $region11: #{tpu_custom_call.1} parent=1 // pred_check_branch
      %43 = sbr.rel (0) target = $region13
    $region12: #{tpu_custom_call.1} parent=1 // pred_region
      %44 = dma.done [#allocation3], 256
    $region13: #{tpu_custom_call.1} parent=1 // pred_fallthru
      _
    // Predicated region
    $region14: #{tpu_custom_call.1} parent=1 // pred_check
      _
    $region15: #{tpu_custom_call.1} parent=1 // pred_check_branch
      %46 = sbr.rel (0) target = $region17
    $region16: #{tpu_custom_call.1} parent=1 // pred_region
      %47 = dma.done [#allocation6], 256
    $region17: #{tpu_custom_call.1} parent=1 // pred_fallthru
      _
    %s48 = sadd.s32 0, 0
    %s49 = smul.u32 2, %s48
    %s50 = sadd.s32 0, 0
    %s51 = smul.u32 2, %s50
    %p52 = scmp.eq.s32.totalorder 0, 0
    // Predicated region
    $region18: #{tpu_custom_call.1} parent=1 // pred_check
      %p53 = pneg %p52
    $region19: #{tpu_custom_call.1} parent=1 // pred_check_branch
      %55 = sbr.rel (%p53) target = $region21
    $region20: #{tpu_custom_call.1} parent=1 // pred_region
      %56 = vst [vmem:[#allocation7] sm:$0xff] 0.0
    $region21: #{tpu_custom_call.1} parent=1 // pred_fallthru
      _
    %v57 = vld [vmem:[#allocation2] sm:$0xff]
    %v58 = vld [vmem:[#allocation2 + $0x8] sm:$0xff]
    %v59 = vld [vmem:[#allocation5] sm:$0xff]
    %v60 = vld [vmem:[#allocation5 + $0x8] sm:$0xff]
    %v61 = vsub.f32 %v57, %v59
    %v62 = vsub.f32 %v58, %v60
    %v63 = vand.u32 2147483647, %v61
    %v64 = vand.u32 2147483647, %v62
    %v65 = vadd.f32 %v63, %v64
    %v66 = vadd.f32 %v65, 0.0
    %v67 = vld [vmem:[#allocation7] sm:$0xff]
    %v68 = vadd.f32 %v67, %v66
    %69 = vst [vmem:[#allocation7] sm:$0xff] %v68
    // Predicated region
    $region22: #{tpu_custom_call.1} parent=1 // pred_check
      _
    $region23: #{tpu_custom_call.1} parent=1 // pred_check_branch
      %71 = sbr.rel (0) target = $region25
    $region24: #{tpu_custom_call.1} parent=1 // pred_region
      %s73 = ssub.s32 128, 128
      %74 = vsyncadd [#allocation4], %s73
      %s76 = sshll.u32 [#allocation7], 4
      %s77 = int_to_ptr.vmem [resolvable:$true] %s76
      %79 = dma.vmem_to_hbm [thread:$0]  %s77, 128, %s2, [#allocation4]
    $region25: #{tpu_custom_call.1} parent=1 // pred_fallthru
      _
    // Predicated region
    $region26: #{tpu_custom_call.1} parent=1 // pred_check
      _
    $region27: #{tpu_custom_call.1} parent=1 // pred_check_branch
      %81 = sbr.rel (0) target = $region29
    $region28: #{tpu_custom_call.1} parent=1 // pred_region
      %82 = dma.done [#allocation4], 128
    $region29: #{tpu_custom_call.1} parent=1 // pred_fallthru
      _
    %83 = vsyncpa [#allocation3], 1
    %84 = vsyncpa [#allocation6], 1
    %85 = vsyncpa [#allocation4], 1

</llo_original>
